<compile_context>
chip_gen: v7x
topology: tpu7x:2x2x1
jax: 0.10.0
libtpu: 0.0.40
codegen_flags: <defaults>
</compile_context>

<pallas_src>
import functools

import jax
import jax.numpy as jnp
from jax.experimental import pallas as pl
from jax.experimental.pallas import tpu as pltpu

H1, H2 = 64, 32  # hidden sizes from the module definition


def _round_up(n, m):
    return -(-n // m) * m


# -----------------------------------------------------------------------------
# Parameter packing: one f32 buffer (64, width), transposed ("out, in") layout,
# every piece starting at a 128-lane-aligned column so in-kernel slices are
# free (no lane realign copies):
#   cols [0      : sd   ) : W1^T   (64, sd)
#   col  c1 = rup(sd,128) : b1     (64,)
#   cols [c2, c2+64)      : W2^T   (32, 64)   (rows 32:64 unused)
#   col  c3               : b2     (32,)
#   cols [c4, c4+32)      : W3^T   (n_actions, 32)
# b3 is NOT packed: a per-action constant cancels exactly under Softmax(dim=0).
# -----------------------------------------------------------------------------
def pack_params(params, state_dim, n_actions):
    w1, b1, w2, b2, w3, _b3 = params
    assert n_actions <= H1, "packing assumes n_actions <= 64"
    sd = state_dim
    c1 = _round_up(sd, 128)
    c2 = c1 + 128
    c3 = c2 + 128
    c4 = c3 + 128
    width = c4 + 128
    P = jnp.zeros((H1, width), jnp.float32)
    P = P.at[:, :sd].set(w1.T)
    P = P.at[:, c1].set(b1[0])
    P = P.at[:H2, c2:c2 + H1].set(w2.T)
    P = P.at[:H2, c3].set(b2[0])
    P = P.at[:n_actions, c4:c4 + H2].set(w3.T)
    return P, (c1, c2, c3, c4)


def _mlp_logits(x_blk, P, *, sd, a_pad, c1, c2, c3, c4):
    # x_blk: (tb, sd) f32 in native layout ; P: (64, width) f32
    # returns logits^T: (a_pad, tb) f32  (batch on the 128-lane axis).
    w1t = P[:, :sd]                                  # (64, sd)   aligned slice
    b1 = P[:, c1:c1 + 1]                             # (64, 1)
    h1 = jnp.tanh(
        jax.lax.dot_general(w1t, x_blk, (((1,), (1,)), ((), ())),
                            preferred_element_type=jnp.float32) + b1)
    w2t = P[:H2, c2:c2 + H1]                         # (32, 64)  true 32 rows
    b2 = P[:H2, c3:c3 + 1]                           # (32, 1)
    h2 = jnp.tanh(jnp.dot(w2t, h1, preferred_element_type=jnp.float32) + b2)
    w3t = P[:a_pad, c4:c4 + H2]                      # (a_pad, 32)
    return jnp.dot(w3t, h2, preferred_element_type=jnp.float32)  # (a_pad, tb)


def _fused_kernel(x_ref, p_ref, o_ref, *, sd, a_pad, c1, c2, c3, c4):
    # Small batch: logits + exact dim-0 softmax (over lanes) in one kernel.
    logits = _mlp_logits(x_ref[...], p_ref[...], sd=sd, a_pad=a_pad,
                         c1=c1, c2=c2, c3=c3, c4=c4)
    m = jnp.max(logits, axis=1, keepdims=True)
    e = jnp.exp(logits - m)
    s = jnp.sum(e, axis=1, keepdims=True)
    o_ref[...] = e / s                                # exact divide


def _logits_kernel(x_ref, p_ref, o_ref, *, sd, a_pad, c1, c2, c3, c4):
    o_ref[...] = _mlp_logits(x_ref[...], p_ref[...], sd=sd, a_pad=a_pad,
                             c1=c1, c2=c2, c3=c3, c4=c4)


def actor_forward(x, params, *, tile_b=None, fuse_threshold=1024):
    """Forward pass of Actor.  x: (B, state_dim) f32 -> (B, n_actions) f32."""
    B, sd = x.shape
    n_actions = params[4].shape[1]
    a_pad = max(8, _round_up(n_actions, 8))           # sublane-aligned rows
    P, (c1, c2, c3, c4) = pack_params(params, sd, n_actions)
    kern_kw = dict(sd=sd, a_pad=a_pad, c1=c1, c2=c2, c3=c3, c4=c4)
    vmem = pl.BlockSpec(memory_space=pltpu.MemorySpace.VMEM)

    if B <= fuse_threshold:
        # Small batch: one fused call (launch/DMA-descriptor bound regime),
        # 2 inputs, no grid, softmax done in-kernel.
        probs_t = pl.pallas_call(
            functools.partial(_fused_kernel, **kern_kw),
            out_shape=jax.ShapeDtypeStruct((a_pad, B), jnp.float32),
            in_specs=[vmem, vmem],
            out_specs=vmem,
        )(x, P)
        return probs_t[:n_actions, :].T               # (B, n_actions)

    # Large batch: single gridded kernel producing logits^T, batch tiled on a
    # "parallel" grid.  Tile chosen large (fewer grid steps, big lane-dense
    # stores) but capped so there are >= 2 tiles (both TCs on v7x).
    if tile_b is None:
        tile_b = min(4096, _round_up(pl.cdiv(B, 2), 128))
    tile_b = max(128, _round_up(tile_b, 128))
    n_tiles = pl.cdiv(B, tile_b)
    pw = P.shape[1]
    logits_t = pl.pallas_call(
        functools.partial(_logits_kernel, **kern_kw),
        out_shape=jax.ShapeDtypeStruct((a_pad, B), jnp.float32),
        grid=(n_tiles,),
        in_specs=[
            pl.BlockSpec((tile_b, sd), lambda i: (i, 0)),   # x, native layout
            pl.BlockSpec((H1, pw), lambda i: (0, 0)),       # weights resident
        ],
        out_specs=pl.BlockSpec((a_pad, tile_b), lambda i: (0, i)),
        compiler_params=pltpu.CompilerParams(
            dimension_semantics=("parallel",)),
    )(x, P)
    # Ragged last tile: OOB input columns produce garbage logits, but their
    # output columns fall outside (a_pad, B) and are dropped by Pallas.
    # The tiny (n_actions, B) dim-0 softmax + transpose is left to XLA so it
    # fuses with the final slice (exact normalization, no 2nd Pallas launch).
    logits = logits_t[:n_actions, :]
    return jax.nn.softmax(logits, axis=1).T           # (B, n_actions)


def init_params(key, state_dim, n_actions):
    ks = jax.random.split(key, 6)

    def lin(kw, kb, fan_in, fan_out):
        bound = 1.0 / jnp.sqrt(fan_in)
        w = jax.random.uniform(kw, (fan_in, fan_out), jnp.float32, -bound, bound)
        b = jax.random.uniform(kb, (1, fan_out), jnp.float32, -bound, bound)
        return w, b

    w1, b1 = lin(ks[0], ks[1], state_dim, H1)
    w2, b2 = lin(ks[2], ks[3], H1, H2)
    w3, b3 = lin(ks[4], ks[5], H2, n_actions)
    return (w1, b1, w2, b2, w3, b3)


def actor_ref(x, params):
    # Pure-JAX reference of the original module semantics (b3 included).
    w1, b1, w2, b2, w3, b3 = params
    h1 = jnp.tanh(x @ w1 + b1)
    h2 = jnp.tanh(h1 @ w2 + b2)
    logits = h2 @ w3 + b3
    return jax.nn.softmax(logits, axis=0)


if __name__ == "__main__":
    key = jax.random.PRNGKey(0)
    k_param, k1, k2, k3 = jax.random.split(key, 4)

    state_dim, n_actions = 16, 8
    params = init_params(k_param, state_dim, n_actions)

    def check(out, ref, B):
        assert out.shape == (B, n_actions)
        assert jnp.allclose(out, ref, atol=2e-3, rtol=2e-3)
        # Softmax(dim=0): every action column sums to 1 over the batch.
        assert jnp.allclose(jnp.sum(out, axis=0), 1.0, atol=2e-3)

    # --- small batch: fused single-call path --------------------------------
    B1 = 8
    x1 = jax.random.normal(k1, (B1, state_dim), jnp.float32)
    out1 = jax.block_until_ready(actor_forward(x1, params))
    check(out1, actor_ref(x1, params), B1)

    # --- gridded path, forced small tiles: 2 parallel tiles + ragged tail ---
    B2 = 200
    x2 = jax.random.normal(k2, (B2, state_dim), jnp.float32)
    out2 = jax.block_until_ready(
        actor_forward(x2, params, tile_b=128, fuse_threshold=64))
    check(out2, actor_ref(x2, params), B2)

    # --- gridded path with the default tile selection (>= 2 tiles) ----------
    B3 = 1300
    x3 = jax.random.normal(k3, (B3, state_dim), jnp.float32)
    out3 = jax.block_until_ready(actor_forward(x3, params))
    check(out3, actor_ref(x3, params), B3)

    print("KERNEL_OK")
</pallas_src>

<mosaic_0001>
module attributes {stable_mosaic.version = 11 : i64} {
  func.func @_fused_kernel(%arg0: memref<8x16xf32, #tpu.memory_space<vmem>>, %arg1: memref<64x640xf32, #tpu.memory_space<vmem>>, %arg2: memref<8x8xf32, #tpu.memory_space<vmem>>) attributes {dimension_semantics = [], scalar_prefetch = 0 : i64, scratch_operands = 0 : i64, tpu.core_type = #tpu.core_type<tc>} {
    %c0 = arith.constant 0 : index
    %c0_0 = arith.constant 0 : index
    %0 = vector.load %arg0[%c0, %c0_0] : memref<8x16xf32, #tpu.memory_space<vmem>>, vector<8x16xf32>
    %c0_1 = arith.constant 0 : index
    %c0_2 = arith.constant 0 : index
    %1 = vector.load %arg1[%c0_1, %c0_2] : memref<64x640xf32, #tpu.memory_space<vmem>>, vector<64x640xf32>
    %2 = vector.extract_strided_slice %1 {offsets = [0, 0], sizes = [64, 16], strides = [1, 1]} : vector<64x640xf32> to vector<64x16xf32>
    %3 = vector.extract_strided_slice %1 {offsets = [0, 128], sizes = [64, 1], strides = [1, 1]} : vector<64x640xf32> to vector<64x1xf32>
    %cst = arith.constant dense<0.000000e+00> : vector<64x8xf32>
    %4 = tpu.matmul %2, %0, %cst {dimension_numbers = #tpu.dot_dimension_numbers<[1], [1], [0], [0], [0, 0, 1, 0], [], []>} : vector<64x16xf32>, vector<8x16xf32>, vector<64x8xf32> -> vector<64x8xf32>
    %5 = vector.broadcast %3 : vector<64x1xf32> to vector<64x8xf32>
    %6 = arith.addf %4, %5 : vector<64x8xf32>
    %7 = math.tanh %6 : vector<64x8xf32>
    %8 = vector.extract_strided_slice %1 {offsets = [0, 256], sizes = [32, 64], strides = [1, 1]} : vector<64x640xf32> to vector<32x64xf32>
    %9 = vector.extract_strided_slice %1 {offsets = [0, 384], sizes = [32, 1], strides = [1, 1]} : vector<64x640xf32> to vector<32x1xf32>
    %cst_3 = arith.constant dense<0.000000e+00> : vector<32x8xf32>
    %10 = tpu.matmul %8, %7, %cst_3 {dimension_numbers = #tpu.dot_dimension_numbers<[1], [0], [0], [1], [0, 0, 1, 1], [], []>} : vector<32x64xf32>, vector<64x8xf32>, vector<32x8xf32> -> vector<32x8xf32>
    %11 = vector.broadcast %9 : vector<32x1xf32> to vector<32x8xf32>
    %12 = arith.addf %10, %11 : vector<32x8xf32>
    %13 = math.tanh %12 : vector<32x8xf32>
    %14 = vector.extract_strided_slice %1 {offsets = [0, 512], sizes = [8, 32], strides = [1, 1]} : vector<64x640xf32> to vector<8x32xf32>
    %cst_4 = arith.constant dense<0.000000e+00> : vector<8x8xf32>
    %15 = tpu.matmul %14, %13, %cst_4 {dimension_numbers = #tpu.dot_dimension_numbers<[1], [0], [0], [1], [0, 0, 1, 1], [], []>} : vector<8x32xf32>, vector<32x8xf32>, vector<8x8xf32> -> vector<8x8xf32>
    %cst_5 = arith.constant dense<0xFF800000> : vector<8xf32>
    %16 = vector.multi_reduction <maximumf>, %15, %cst_5 [1] : vector<8x8xf32> to vector<8xf32>
    %17 = vector.shape_cast %16 : vector<8xf32> to vector<8x1xf32>
    %18 = vector.broadcast %17 : vector<8x1xf32> to vector<8x8xf32>
    %19 = arith.subf %15, %18 : vector<8x8xf32>
    %20 = math.exp %19 : vector<8x8xf32>
    %cst_6 = arith.constant dense<0.000000e+00> : vector<8xf32>
    %21 = vector.multi_reduction <add>, %20, %cst_6 [1] : vector<8x8xf32> to vector<8xf32>
    %22 = vector.shape_cast %21 : vector<8xf32> to vector<8x1xf32>
    %23 = vector.broadcast %22 : vector<8x1xf32> to vector<8x8xf32>
    %24 = arith.divf %20, %23 : vector<8x8xf32>
    %c0_7 = arith.constant 0 : index
    %c0_8 = arith.constant 0 : index
    %25 = vector.load %arg2[%c0_7, %c0_8] : memref<8x8xf32, #tpu.memory_space<vmem>>, vector<8x8xf32>
    tpu.vector_store %arg2[%c0_7, %c0_8], %24 {strides = array<i32>} : memref<8x8xf32, #tpu.memory_space<vmem>>, vector<8x8xf32>,
    return
  }
}

</mosaic_0001>

<llo_original>
// kernel: tpu_custom_call.1
$region0: #{tpu_custom_call.1}
  #allocation0 [shape = 'u32[]', space=smem, size = 0x4, offset = 0x4, fixed_abs, tag = 'smem constant byte address 0x4 - core index']
  #allocation1 [shape = 'u32[144,128]{1,0:T(1,128)}', space=vmem, size = 0x12000, scoped, tag = 'internal scratch']
  %s0 = inlined_call_operand.hbm [shape: f32[8,16], index: 0, kind: input, shape index: {}]
  %s1 = inlined_call_operand.hbm [shape: f32[64,640], index: 1, kind: input, shape index: {}]
  %s2 = inlined_call_operand.hbm [shape: f32[8,8], index: 2, kind: output, shape index: {}]
  %s3 = sld [smem:[#allocation0]]
  $region26: #{tpu_custom_call.1} parent=0
    _
  %s5 = ssub.s32 1, %s3
  %s6 = scalar_select 0, %s5, %s3
  $region1: #{tpu_custom_call.1} parent=0
    #allocation2 [shape = 'u8[4096]{0}', space=vmem, size = 0x1000, scoped, tag = 'input window, operand 0, single buffered']
    #allocation3 [shape = 's32[1]{0}', space=sflag, size = 0x4, scoped, tag = 'scoped memory for tpu_custom_call.1']
    #allocation4 [shape = 's32[1]{0}', space=sflag, size = 0x4, scoped, tag = 'scoped memory for tpu_custom_call.1']
    #allocation5 [shape = 'u8[163840]{0}', space=vmem, size = 0x28000, scoped, tag = 'input window, operand 1, single buffered']
    #allocation6 [shape = 's32[1]{0}', space=sflag, size = 0x4, scoped, tag = 'scoped memory for tpu_custom_call.1']
    #allocation7 [shape = 'u8[4096]{0}', space=vmem, size = 0x1000, scoped, tag = 'output window, operand 0, single buffered']
    %7 = vsyncpa [#allocation3], 0
    %8 = vsyncpa [#allocation6], 0
    %9 = vsyncpa [#allocation4], 0
    // Predicated region
    $region2: #{tpu_custom_call.1} parent=1 // pred_check
      _
    $region3: #{tpu_custom_call.1} parent=1 // pred_check_branch
      %11 = sbr.rel (0) target = $region5
    $region4: #{tpu_custom_call.1} parent=1 // pred_region
      %s13 = ssub.s32 128, 128
      %14 = vsyncadd [#allocation3], %s13
      %s16 = sshll.u32 [#allocation2], 4
      %s17 = int_to_ptr.vmem [resolvable:$true] %s16
      %19 = dma.hbm_to_vmem [thread:$0]  %s0, 128, %s17, [#allocation3]
    $region5: #{tpu_custom_call.1} parent=1 // pred_fallthru
      _
    // Predicated region
    $region6: #{tpu_custom_call.1} parent=1 // pred_check
      _
    $region7: #{tpu_custom_call.1} parent=1 // pred_check_branch
      %21 = sbr.rel (0) target = $region9
    $region8: #{tpu_custom_call.1} parent=1 // pred_region
      %s23 = ssub.s32 5120, 5120
      %24 = vsyncadd [#allocation6], %s23
      %s25 = sshll.u32 [#allocation5], 4
      %s26 = int_to_ptr.vmem [resolvable:$true] %s25
      %31 = dma.hbm_to_vmem [thread:$0]  %s1, 5120, %s26, [#allocation6], 640, 640, 40
    $region9: #{tpu_custom_call.1} parent=1 // pred_fallthru
      _
    // Predicated region
    $region10: #{tpu_custom_call.1} parent=1 // pred_check
      _
    $region11: #{tpu_custom_call.1} parent=1 // pred_check_branch
      %33 = sbr.rel (0) target = $region13
    $region12: #{tpu_custom_call.1} parent=1 // pred_region
      %34 = dma.done [#allocation3], 128
    $region13: #{tpu_custom_call.1} parent=1 // pred_fallthru
      _
    // Predicated region
    $region14: #{tpu_custom_call.1} parent=1 // pred_check
      _
    $region15: #{tpu_custom_call.1} parent=1 // pred_check_branch
      %36 = sbr.rel (0) target = $region17
    $region16: #{tpu_custom_call.1} parent=1 // pred_region
      %37 = dma.done [#allocation6], 5120
    $region17: #{tpu_custom_call.1} parent=1 // pred_fallthru
      _
    %v38 = vld [vmem:[#allocation2] sm:$0xff]
    %v39 = vld [vmem:[#allocation5] sm:$0xff]
    %v40 = vld [vmem:[#allocation5 + $0x8] sm:$0xff]
    %v41 = vld [vmem:[#allocation5 + $0x10] sm:$0xff]
    %v42 = vld [vmem:[#allocation5 + $0x18] sm:$0xff]
    %v43 = vld [vmem:[#allocation5 + $0x20] sm:$0xff]
    %v44 = vld [vmem:[#allocation5 + $0x28] sm:$0xff]
    %v45 = vld [vmem:[#allocation5 + $0x30] sm:$0xff]
    %v46 = vld [vmem:[#allocation5 + $0x38] sm:$0xff]
    %v47 = vld [vmem:[#allocation5 + $0x40] sm:$0xff]
    %v48 = vld [vmem:[#allocation5 + $0x50] sm:$0xff]
    %v49 = vld [vmem:[#allocation5 + $0x58] sm:$0xff]
    %v50 = vld [vmem:[#allocation5 + $0x60] sm:$0xff]
    %v51 = vld [vmem:[#allocation5 + $0x68] sm:$0xff]
    %v52 = vld [vmem:[#allocation5 + $0x78] sm:$0xff]
    %v53 = vld [vmem:[#allocation5 + $0x80] sm:$0xff]
    %v54 = vld [vmem:[#allocation5 + $0x88] sm:$0xff]
    %v55 = vld [vmem:[#allocation5 + $0x90] sm:$0xff]
    %v56 = vld [vmem:[#allocation5 + $0xa0] sm:$0xff]
    %v57 = vld [vmem:[#allocation5 + $0xa8] sm:$0xff]
    %v58 = vld [vmem:[#allocation5 + $0xc8] sm:$0xff]
    %v59 = vld [vmem:[#allocation5 + $0xd0] sm:$0xff]
    %v60 = vld [vmem:[#allocation5 + $0xf0] sm:$0xff]
    %v61 = vld [vmem:[#allocation5 + $0xf8] sm:$0xff]
    %v62 = vld [vmem:[#allocation5 + $0x118] sm:$0xff]
    %v63 = vld [vmem:[#allocation5 + $0x120] sm:$0xff]
    %65 = vset.pattern.permute.xlu0 0
    %66 = vperm.xlu0 %65, %v40
    %v67 = vpop.permute.xlu0 %66
    %70 = vset.pattern.permute.xlu0 0
    %71 = vperm.xlu0 %70, %v45
    %v72 = vpop.permute.xlu0 %71
    %75 = vset.pattern.permute.xlu0 0
    %76 = vperm.xlu0 %75, %v49
    %v77 = vpop.permute.xlu0 %76
    %80 = vset.pattern.permute.xlu0 0
    %81 = vperm.xlu0 %80, %v53
    %v82 = vpop.permute.xlu0 %81
    %85 = vset.pattern.permute.xlu0 0
    %86 = vperm.xlu0 %85, %v57
    %v87 = vpop.permute.xlu0 %86
    %90 = vset.pattern.permute.xlu0 0
    %91 = vperm.xlu0 %90, %v59
    %v92 = vpop.permute.xlu0 %91
    %95 = vset.pattern.permute.xlu0 0
    %96 = vperm.xlu0 %95, %v61
    %v97 = vpop.permute.xlu0 %96
    %100 = vset.pattern.permute.xlu0 0
    %101 = vperm.xlu0 %100, %v63
    %v102 = vpop.permute.xlu0 %101
    %vm104 = vcmask 130048
    %v106 = vsel %vm104, %v39, 0
    %v109 = vsel %vm104, %v44, 0
    %v112 = vsel %vm104, %v48, 0
    %v115 = vsel %vm104, %v52, 0
    %v118 = vsel %vm104, %v56, 0
    %v121 = vsel %vm104, %v58, 0
    %v124 = vsel %vm104, %v60, 0
    %v127 = vsel %vm104, %v62, 0
    %v130 = vsel %vm104, %v38, 0
    %132 = vmatprep.subr.mxu0 0.0
    %133 = vmatpush1.xpose.msra.mxu0 %v130
    %134 = vmatprep.subr.mxu0 0.0
    %135 = vmatpush1.xpose.msra.mxu0 0.0
    %136 = vmatprep.subr.mxu0 0.0
    %137 = vmatpush1.xpose.msra.mxu0 0.0
    %138 = vmatprep.subr.mxu0 0.0
    %139 = vmatpush1.xpose.msra.mxu0 0.0
    %140 = vmatprep.subr.mxu0 0.0
    %141 = vmatpush1.xpose.msra.mxu0 0.0
    %142 = vmatprep.subr.mxu0 0.0
    %143 = vmatpush1.xpose.msra.mxu0 0.0
    %144 = vmatprep.subr.mxu0 0.0
    %145 = vmatpush1.xpose.msra.mxu0 0.0
    %146 = vmatprep.subr.mxu0 0.0
    %147 = vmatpush1.xpose.msra.mxu0 0.0
    %148 = vmatprep.subr.mxu0 0.0
    %149 = vmatpush1.xpose.msra.mxu0 0.0
    %150 = vmatprep.subr.mxu0 0.0
    %151 = vmatpush1.xpose.msra.mxu0 0.0
    %152 = vmatprep.subr.mxu0 0.0
    %153 = vmatpush1.xpose.msra.mxu0 0.0
    %154 = vmatprep.subr.mxu0 0.0
    %155 = vmatpush1.xpose.msra.mxu0 0.0
    %156 = vmatprep.subr.mxu0 0.0
    %157 = vmatpush1.xpose.msra.mxu0 0.0
    %158 = vmatprep.subr.mxu0 0.0
    %159 = vmatpush1.xpose.msra.mxu0 0.0
    %160 = vmatprep.subr.mxu0 0.0
    %161 = vmatpush1.xpose.msra.mxu0 0.0
    %162 = vmatprep.subr.mxu0 0.0
    %163 = vmatpush1.xpose.msra.mxu0 0.0
    %164 = vmatprep.subr.mxu0 0.0
    %165 = vmatpush1.xpose.msra.mxu0 0.0
    %166 = vmatprep.subr.mxu0 0.0
    %167 = vmatpush1.xpose.msra.mxu0 0.0
    %168 = vmatprep.subr.mxu0 0.0
    %169 = vmatpush1.xpose.msra.mxu0 0.0
    %170 = vmatprep.subr.mxu0 0.0
    %171 = vmatpush1.xpose.msra.mxu0 0.0
    %172 = vmatprep.subr.mxu0 0.0
    %173 = vmatpush1.xpose.msra.mxu0 0.0
    %174 = vmatprep.subr.mxu0 0.0
    %175 = vmatpush1.xpose.msra.mxu0 0.0
    %176 = vmatprep.subr.mxu0 0.0
    %177 = vmatpush1.xpose.msra.mxu0 0.0
    %178 = vmatprep.subr.mxu0 0.0
    %179 = vmatpush1.xpose.msra.mxu0 0.0
    %180 = vmatprep.subr.mxu0 0.0
    %181 = vmatpush1.xpose.msra.mxu0 0.0
    %182 = vmatprep.subr.mxu0 0.0
    %183 = vmatpush1.xpose.msra.mxu0 0.0
    %184 = vmatprep.subr.mxu0 0.0
    %185 = vmatpush1.xpose.msra.mxu0 0.0
    %186 = vmatprep.subr.mxu0 0.0
    %187 = vmatpush1.xpose.msra.mxu0 0.0
    %188 = vmatprep.subr.mxu0 0.0
    %189 = vmatpush1.xpose.msra.mxu0 0.0
    %190 = vmatprep.subr.mxu0 0.0
    %191 = vmatpush1.xpose.msra.mxu0 0.0
    %192 = vmatprep.subr.mxu0 0.0
    %193 = vmatpush1.xpose.msra.mxu0 0.0
    %194 = vmatprep.subr.mxu0 0.0
    %195 = vmatpush1.xpose.msra.mxu0 0.0
    %196 = vmatprep.mubr.f32.mxu0 0.0
    %197 = vmatmul.mubr.f32.gmra.mrb[0].mxu0 %v106
    %v198 = vpop.f32.mrb[0].mxu0
    %v199 = vadd.f32 %v67, %v198
    %v200 = vpop.f32.mrb[0].mxu0
    %201 = vmatprep.mubr.f32.mxu0 0.0
    %202 = vmatmul.mubr.f32.gmra.mrb[0].mxu0 %v109
    %v203 = vpop.f32.mrb[0].mxu0
    %v204 = vadd.f32 %v72, %v203
    %v205 = vpop.f32.mrb[0].mxu0
    %206 = vmatprep.mubr.f32.mxu0 0.0
    %207 = vmatmul.mubr.f32.gmra.mrb[0].mxu0 %v112
    %v208 = vpop.f32.mrb[0].mxu0
    %v209 = vadd.f32 %v77, %v208
    %v210 = vpop.f32.mrb[0].mxu0
    %211 = vmatprep.mubr.f32.mxu0 0.0
    %212 = vmatmul.mubr.f32.gmra.mrb[0].mxu0 %v115
    %v213 = vpop.f32.mrb[0].mxu0
    %v214 = vadd.f32 %v82, %v213
    %v215 = vpop.f32.mrb[0].mxu0
    %216 = vmatprep.mubr.f32.mxu0 0.0
    %217 = vmatmul.mubr.f32.gmra.mrb[0].mxu0 %v118
    %v218 = vpop.f32.mrb[0].mxu0
    %v219 = vadd.f32 %v87, %v218
    %v220 = vpop.f32.mrb[0].mxu0
    %221 = vmatprep.mubr.f32.mxu0 0.0
    %222 = vmatmul.mubr.f32.gmra.mrb[0].mxu0 %v121
    %v223 = vpop.f32.mrb[0].mxu0
    %v224 = vadd.f32 %v92, %v223
    %v225 = vpop.f32.mrb[0].mxu0
    %226 = vmatprep.mubr.f32.mxu0 0.0
    %227 = vmatmul.mubr.f32.gmra.mrb[0].mxu0 %v124
    %v228 = vpop.f32.mrb[0].mxu0
    %v229 = vadd.f32 %v97, %v228
    %v230 = vpop.f32.mrb[0].mxu0
    %231 = vmatprep.mubr.f32.mxu0 0.0
    %232 = vmatmul.mubr.f32.gmra.mrb[0].mxu0 %v127
    %v233 = vpop.f32.mrb[0].mxu0
    %v234 = vadd.f32 %v102, %v233
    %v235 = vpop.f32.mrb[0].mxu0
    %236 = vdwg.mxu0
    %v237 = vtanh.pop %v199
    %v238 = vtanh.pop %v204
    %v239 = vtanh.pop %v209
    %v240 = vtanh.pop %v214
    %v241 = vtanh.pop %v219
    %v242 = vtanh.pop %v224
    %v243 = vtanh.pop %v229
    %v244 = vtanh.pop %v234
    %246 = vset.pattern.permute.xlu0 0
    %247 = vperm.xlu0 %246, %v42
    %v248 = vpop.permute.xlu0 %247
    %251 = vset.pattern.permute.xlu0 0
    %252 = vperm.xlu0 %251, %v47
    %v253 = vpop.permute.xlu0 %252
    %256 = vset.pattern.permute.xlu0 0
    %257 = vperm.xlu0 %256, %v51
    %v258 = vpop.permute.xlu0 %257
    %261 = vset.pattern.permute.xlu0 0
    %262 = vperm.xlu0 %261, %v55
    %v263 = vpop.permute.xlu0 %262
    %vm265 = vcmask 523264
    %v267 = vsel %vm265, %v41, 0
    %v270 = vsel %vm265, %v46, 0
    %v273 = vsel %vm265, %v50, 0
    %v276 = vsel %vm265, %v54, 0
    %278 = vmatprep.subr.mxu0 0.0
    %279 = vmatpush1.msra.mxu0 %v237
    %280 = vmatprep.subr.mxu0 0.0
    %281 = vmatpush1.msra.mxu0 %v238
    %282 = vmatprep.subr.mxu0 0.0
    %283 = vmatpush1.msra.mxu0 %v239
    %284 = vmatprep.subr.mxu0 0.0
    %285 = vmatpush1.msra.mxu0 %v240
    %286 = vmatprep.subr.mxu0 0.0
    %287 = vmatpush1.msra.mxu0 %v241
    %288 = vmatprep.subr.mxu0 0.0
    %289 = vmatpush1.msra.mxu0 %v242
    %290 = vmatprep.subr.mxu0 0.0
    %291 = vmatpush1.msra.mxu0 %v243
    %292 = vmatprep.subr.mxu0 0.0
    %293 = vmatpush1.msra.mxu0 %v244
    %294 = vmatprep.subr.mxu0 0.0
    %295 = vmatpush1.msra.mxu0 0.0
    %296 = vmatprep.subr.mxu0 0.0
    %297 = vmatpush1.msra.mxu0 0.0
    %298 = vmatprep.subr.mxu0 0.0
    %299 = vmatpush1.msra.mxu0 0.0
    %300 = vmatprep.subr.mxu0 0.0
    %301 = vmatpush1.msra.mxu0 0.0
    %302 = vmatprep.subr.mxu0 0.0
    %303 = vmatpush1.msra.mxu0 0.0
    %304 = vmatprep.subr.mxu0 0.0
    %305 = vmatpush1.msra.mxu0 0.0
    %306 = vmatprep.subr.mxu0 0.0
    %307 = vmatpush1.msra.mxu0 0.0
    %308 = vmatprep.subr.mxu0 0.0
    %309 = vmatpush1.msra.mxu0 0.0
    %310 = vmatprep.subr.mxu0 0.0
    %311 = vmatpush1.msra.mxu0 0.0
    %312 = vmatprep.subr.mxu0 0.0
    %313 = vmatpush1.msra.mxu0 0.0
    %314 = vmatprep.subr.mxu0 0.0
    %315 = vmatpush1.msra.mxu0 0.0
    %316 = vmatprep.subr.mxu0 0.0
    %317 = vmatpush1.msra.mxu0 0.0
    %318 = vmatprep.subr.mxu0 0.0
    %319 = vmatpush1.msra.mxu0 0.0
    %320 = vmatprep.subr.mxu0 0.0
    %321 = vmatpush1.msra.mxu0 0.0
    %322 = vmatprep.subr.mxu0 0.0
    %323 = vmatpush1.msra.mxu0 0.0
    %324 = vmatprep.subr.mxu0 0.0
    %325 = vmatpush1.msra.mxu0 0.0
    %326 = vmatprep.subr.mxu0 0.0
    %327 = vmatpush1.msra.mxu0 0.0
    %328 = vmatprep.subr.mxu0 0.0
    %329 = vmatpush1.msra.mxu0 0.0
    %330 = vmatprep.subr.mxu0 0.0
    %331 = vmatpush1.msra.mxu0 0.0
    %332 = vmatprep.subr.mxu0 0.0
    %333 = vmatpush1.msra.mxu0 0.0
    %334 = vmatprep.subr.mxu0 0.0
    %335 = vmatpush1.msra.mxu0 0.0
    %336 = vmatprep.subr.mxu0 0.0
    %337 = vmatpush1.msra.mxu0 0.0
    %338 = vmatprep.subr.mxu0 0.0
    %339 = vmatpush1.msra.mxu0 0.0
    %340 = vmatprep.subr.mxu0 0.0
    %341 = vmatpush1.msra.mxu0 0.0
    %342 = vmatprep.mubr.f32.mxu0 0.0
    %343 = vmatmul.mubr.f32.gmra.mrb[0].mxu0 %v267
    %v344 = vpop.f32.mrb[0].mxu0
    %v345 = vadd.f32 %v248, %v344
    %v346 = vpop.f32.mrb[0].mxu0
    %347 = vmatprep.mubr.f32.mxu0 0.0
    %348 = vmatmul.mubr.f32.gmra.mrb[0].mxu0 %v270
    %v349 = vpop.f32.mrb[0].mxu0
    %v350 = vadd.f32 %v253, %v349
    %v351 = vpop.f32.mrb[0].mxu0
    %352 = vmatprep.mubr.f32.mxu0 0.0
    %353 = vmatmul.mubr.f32.gmra.mrb[0].mxu0 %v273
    %v354 = vpop.f32.mrb[0].mxu0
    %v355 = vadd.f32 %v258, %v354
    %v356 = vpop.f32.mrb[0].mxu0
    %357 = vmatprep.mubr.f32.mxu0 0.0
    %358 = vmatmul.mubr.f32.gmra.mrb[0].mxu0 %v276
    %v359 = vpop.f32.mrb[0].mxu0
    %v360 = vadd.f32 %v263, %v359
    %v361 = vpop.f32.mrb[0].mxu0
    %362 = vdwg.mxu0
    %v363 = vtanh.pop %v345
    %v364 = vtanh.pop %v350
    %v365 = vtanh.pop %v355
    %v366 = vtanh.pop %v360
    %vm367 = vcmask 261120
    %v369 = vsel %vm367, %v43, 0
    %371 = vmatprep.subr.mxu0 0.0
    %372 = vmatpush1.msra.mxu0 %v363
    %373 = vmatprep.subr.mxu0 0.0
    %374 = vmatpush1.msra.mxu0 %v364
    %375 = vmatprep.subr.mxu0 0.0
    %376 = vmatpush1.msra.mxu0 %v365
    %377 = vmatprep.subr.mxu0 0.0
    %378 = vmatpush1.msra.mxu0 %v366
    %379 = vmatprep.subr.mxu0 0.0
    %380 = vmatpush1.msra.mxu0 0.0
    %381 = vmatprep.subr.mxu0 0.0
    %382 = vmatpush1.msra.mxu0 0.0
    %383 = vmatprep.subr.mxu0 0.0
    %384 = vmatpush1.msra.mxu0 0.0
    %385 = vmatprep.subr.mxu0 0.0
    %386 = vmatpush1.msra.mxu0 0.0
    %387 = vmatprep.subr.mxu0 0.0
    %388 = vmatpush1.msra.mxu0 0.0
    %389 = vmatprep.subr.mxu0 0.0
    %390 = vmatpush1.msra.mxu0 0.0
    %391 = vmatprep.subr.mxu0 0.0
    %392 = vmatpush1.msra.mxu0 0.0
    %393 = vmatprep.subr.mxu0 0.0
    %394 = vmatpush1.msra.mxu0 0.0
    %395 = vmatprep.subr.mxu0 0.0
    %396 = vmatpush1.msra.mxu0 0.0
    %397 = vmatprep.subr.mxu0 0.0
    %398 = vmatpush1.msra.mxu0 0.0
    %399 = vmatprep.subr.mxu0 0.0
    %400 = vmatpush1.msra.mxu0 0.0
    %401 = vmatprep.subr.mxu0 0.0
    %402 = vmatpush1.msra.mxu0 0.0
    %403 = vmatprep.subr.mxu0 0.0
    %404 = vmatpush1.msra.mxu0 0.0
    %405 = vmatprep.subr.mxu0 0.0
    %406 = vmatpush1.msra.mxu0 0.0
    %407 = vmatprep.subr.mxu0 0.0
    %408 = vmatpush1.msra.mxu0 0.0
    %409 = vmatprep.subr.mxu0 0.0
    %410 = vmatpush1.msra.mxu0 0.0
    %411 = vmatprep.subr.mxu0 0.0
    %412 = vmatpush1.msra.mxu0 0.0
    %413 = vmatprep.subr.mxu0 0.0
    %414 = vmatpush1.msra.mxu0 0.0
    %415 = vmatprep.subr.mxu0 0.0
    %416 = vmatpush1.msra.mxu0 0.0
    %417 = vmatprep.subr.mxu0 0.0
    %418 = vmatpush1.msra.mxu0 0.0
    %419 = vmatprep.subr.mxu0 0.0
    %420 = vmatpush1.msra.mxu0 0.0
    %421 = vmatprep.subr.mxu0 0.0
    %422 = vmatpush1.msra.mxu0 0.0
    %423 = vmatprep.subr.mxu0 0.0
    %424 = vmatpush1.msra.mxu0 0.0
    %425 = vmatprep.subr.mxu0 0.0
    %426 = vmatpush1.msra.mxu0 0.0
    %427 = vmatprep.subr.mxu0 0.0
    %428 = vmatpush1.msra.mxu0 0.0
    %429 = vmatprep.subr.mxu0 0.0
    %430 = vmatpush1.msra.mxu0 0.0
    %431 = vmatprep.subr.mxu0 0.0
    %432 = vmatpush1.msra.mxu0 0.0
    %433 = vmatprep.subr.mxu0 0.0
    %434 = vmatpush1.msra.mxu0 0.0
    %435 = vmatprep.mubr.f32.mxu0 0.0
    %436 = vmatmul.mubr.f32.gmra.mrb[0].mxu0 %v369
    %v437 = vpop.f32.mrb[0].mxu0
    %v438 = vadd.f32 0.0, %v437
    %v439 = vpop.f32.mrb[0].mxu0
    %440 = vdwg.mxu0
    %vm441 = vcmask 64512
    %v442 = vsel %vm441, %v438, -inf
    %443 = vmax.xlane.f32.xlu0 %v442
    %v444 = vpop.xlane.xlu0 %443
    %v445 = vsub.f32 %v438, %v444
    %v446 = vmul.f32 %v445, 1.442695
    %v447 = vpow.pop %v446
    %v448 = vsel %vm441, %v447, 0.0
    %449 = vadd.xlane.f32.xlu0 %v448
    %v450 = vpop.xlane.xlu0 %449
    %v451 = vrcp.pop %v450
    %v452 = vmul.f32 %v447, %v451
    %453 = vst.msk [vmem:[#allocation7] sm:$0xff] %vm441, %v452
    // Predicated region
    $region18: #{tpu_custom_call.1} parent=1 // pred_check
      _
    $region19: #{tpu_custom_call.1} parent=1 // pred_check_branch
      %455 = sbr.rel (0) target = $region21
    $region20: #{tpu_custom_call.1} parent=1 // pred_region
      %s457 = ssub.s32 128, 128
      %458 = vsyncadd [#allocation4], %s457
      %s460 = sshll.u32 [#allocation7], 4
      %s461 = int_to_ptr.vmem [resolvable:$true] %s460
      %463 = dma.vmem_to_hbm [thread:$0]  %s461, 128, %s2, [#allocation4]
    $region21: #{tpu_custom_call.1} parent=1 // pred_fallthru
      _
    // Predicated region
    $region22: #{tpu_custom_call.1} parent=1 // pred_check
      _
    $region23: #{tpu_custom_call.1} parent=1 // pred_check_branch
      %465 = sbr.rel (0) target = $region25
    $region24: #{tpu_custom_call.1} parent=1 // pred_region
      %466 = dma.done [#allocation4], 128
    $region25: #{tpu_custom_call.1} parent=1 // pred_fallthru
      _
    %467 = vsyncpa [#allocation3], 1
    %468 = vsyncpa [#allocation6], 1
    %469 = vsyncpa [#allocation4], 1

</llo_original>
